<compile_context>
chip_gen: v7x
topology: tpu7x:2x2x1
jax: 0.10.0
libtpu: 0.0.40
codegen_flags: <defaults>
</compile_context>

<pallas_src>
import jax
import jax.numpy as jnp
from jax.experimental import pallas as pl
from jax.experimental.pallas import tpu as pltpu


def _round_up(x, m):
    return ((x + m - 1) // m) * m


def _cdiv(a, b):
    return (a + b - 1) // b


def _linear_bias_kernel(x_ref, w_ref, b_ref, o_ref, acc_ref):
    k = pl.program_id(2)

    @pl.when(k == 0)
    def _init():
        acc_ref[...] = jnp.zeros_like(acc_ref)

    # Cast the x tile to bf16 on the VPU (hidden under the MXU); the weight
    # tile is prepped bf16.  Accumulate in f32 VMEM scratch.
    acc_ref[...] += jnp.dot(
        x_ref[...].astype(jnp.bfloat16),
        w_ref[...],
        preferred_element_type=jnp.float32,
    )

    @pl.when(k == pl.num_programs(2) - 1)
    def _finalize():
        # Bias added once, in f32, during the accumulator -> output cast.
        o_ref[...] = (acc_ref[...] + b_ref[...].astype(jnp.float32)).astype(
            o_ref.dtype
        )


def choose_tiles(M, K, N, *, x_dtype, out_dtype,
                 tm_max=512, tn_max=512, tk_max=512):
    """Adaptive tile selection: big 256-aligned tiles for large shapes,
    clamped to the (rounded-up) problem size for small shapes."""
    # Sublane granularity for the M (second-minor) axis: 8 when everything is
    # 32-bit, 16 as soon as a bf16 block is involved.
    f32_only = (jnp.dtype(x_dtype).itemsize == 4
                and jnp.dtype(out_dtype).itemsize == 4)
    m_gran = 8 if f32_only else 16

    tm = min(tm_max, _round_up(M, m_gran))
    tn = min(tn_max, _round_up(N, 128))

    # K tile: smallest 128-multiple so the (zero-padded) K splits into equal
    # tiles <= tk_max; keeps K-padding waste minimal.
    kp128 = _round_up(K, 128)
    nk = _cdiv(kp128, tk_max)
    tk = _round_up(_cdiv(kp128, nk), 128)

    # v7x megacore: keep >= 2 parallel (i, j) grid slots so both TensorCores
    # get work; prefer splitting N (x tiles stay re-used), then M; never K.
    if _cdiv(M, tm) * _cdiv(N, tn) < 2:
        if N > 256:
            tn = max(128, _round_up(_cdiv(N, 2), 128))
        elif M > 2 * m_gran:
            tm = max(m_gran, _round_up(_cdiv(M, 2), m_gran))

    return tm, tn, tk


def prepare_linear_params(w, b, *, tk):
    """One-time prep of the Linear delegate's parameters.

    Casts the weight to bf16 (MXU operand dtype) and zero-pads K to a tile
    multiple (zero K-padding is required for correctness).  In a real serving
    path this is called once and cached -- it must not run per step.
    """
    K, N = w.shape
    Kp = _round_up(K, tk)
    wb = w.astype(jnp.bfloat16)
    if Kp != K:
        wb = jnp.pad(wb, ((0, Kp - K), (0, 0)))
    bf = b.astype(jnp.float32).reshape(1, N)
    return wb, bf


def linear_forward(x, wb, bf, *, tm, tn, tk, out_dtype=None, interpret=False):
    """out = x @ W + b with W/b pre-prepared by prepare_linear_params()."""
    M, K = x.shape
    Kp, N = wb.shape
    assert Kp % tk == 0 and Kp >= K and bf.shape == (1, N)
    out_dtype = jnp.dtype(out_dtype if out_dtype is not None else x.dtype)

    # Only K is zero-padded (garbage in a K remainder would corrupt valid
    # outputs).  M / N remainders are handled by the cdiv grid: garbage in
    # partial edge blocks only feeds output elements that are never written.
    if Kp != K:
        x = jnp.pad(x, ((0, 0), (0, Kp - K)))

    grid = (_cdiv(M, tm), _cdiv(N, tn), Kp // tk)
    gm, gn, gk = grid

    x_sz = jnp.dtype(x.dtype).itemsize
    o_sz = out_dtype.itemsize

    # VMEM budget: double-buffered input/output tiles + f32 accumulator.
    tile_bytes = (
        2 * tm * tk * x_sz      # x tiles (original dtype, cast in-kernel)
        + 2 * tk * tn * 2       # w tiles, bf16
        + 2 * tn * 4            # bias tile
        + 2 * tm * tn * o_sz    # output tile
        + tm * tn * 4           # f32 accumulator scratch
    )
    try:
        phys_vmem = int(pltpu.get_tpu_info().vmem_capacity_bytes)
    except Exception:
        phys_vmem = 64 << 20  # conservative (v7x-sized) fallback
    # ~3/4 of physical VMEM: ~96 MiB on v5e/v6e (128 MiB), ~48 MiB on v7x.
    vmem_limit = int(min(max(2 * tile_bytes, 32 << 20), phys_vmem * 3 // 4))

    cost = pl.CostEstimate(
        flops=2 * (gm * tm) * (gn * tn) * Kp,
        transcendentals=0,
        bytes_accessed=int(
            gn * M * Kp * x_sz + gm * Kp * N * 2 + N * 4 + M * N * o_sz
        ),
    )

    return pl.pallas_call(
        _linear_bias_kernel,
        out_shape=jax.ShapeDtypeStruct((M, N), out_dtype),
        grid_spec=pltpu.PrefetchScalarGridSpec(
            num_scalar_prefetch=0,
            grid=grid,
            in_specs=[
                pl.BlockSpec((tm, tk), lambda i, j, k: (i, k)),
                pl.BlockSpec((tk, tn), lambda i, j, k: (k, j)),
                # Bias tile persists across the K axis (block index ignores k).
                pl.BlockSpec((1, tn), lambda i, j, k: (0, j)),
            ],
            out_specs=pl.BlockSpec((tm, tn), lambda i, j, k: (i, j)),
            scratch_shapes=[pltpu.VMEM((tm, tn), jnp.float32)],
        ),
        compiler_params=pltpu.CompilerParams(
            dimension_semantics=("parallel", "parallel", "arbitrary"),
            vmem_limit_bytes=vmem_limit,
        ),
        cost_estimate=cost,
        interpret=interpret,
    )(x, wb, bf)


def wrapped_model_forward(x, w, b, *, out_dtype=None):
    """WrappedModel.forward(x) == self.module(x); delegate module == Linear."""
    M, K = x.shape
    K2, N = w.shape
    assert K == K2 and b.shape == (N,)
    out_dtype = out_dtype if out_dtype is not None else x.dtype
    tm, tn, tk = choose_tiles(M, K, N, x_dtype=x.dtype, out_dtype=out_dtype)
    # NOTE: weight prep is one-time; hoist/cache it outside per-step loops.
    wb, bf = prepare_linear_params(w, b, tk=tk)
    return linear_forward(x, wb, bf, tm=tm, tn=tn, tk=tk, out_dtype=out_dtype)


if __name__ == "__main__":
    key = jax.random.PRNGKey(0)
    k_x, k_w, k_b = jax.random.split(key, 3)

    seq, hidden, hidden_out = 8, 32, 32  # small shapes consistent with Linear

    x = jax.random.normal(k_x, (seq, hidden), dtype=jnp.float32)
    # Deterministic parameter init (synthetic; no checkpoint load).
    w = jax.random.normal(k_w, (hidden, hidden_out), dtype=jnp.float32) * 0.1
    b = jax.random.normal(k_b, (hidden_out,), dtype=jnp.float32) * 0.1

    out = jax.block_until_ready(wrapped_model_forward(x, w, b))

    # Reference for module(x) = x @ W + b with the same bf16 operand rounding
    # the kernel applies (accumulation is f32 in both).
    x16 = x.astype(jnp.bfloat16).astype(jnp.float32)
    w16 = w.astype(jnp.bfloat16).astype(jnp.float32)
    ref = x16 @ w16 + b

    assert out.shape == (seq, hidden_out)
    assert out.dtype == x.dtype
    assert jnp.allclose(out, ref, atol=1e-3, rtol=1e-3)

    print("KERNEL_OK")
</pallas_src>

<mosaic_0001>
module attributes {stable_mosaic.version = 11 : i64} {
  func.func @_linear_bias_kernel(%arg0: i32, %arg1: i32, %arg2: i32, %arg3: memref<8x128xf32, #tpu.memory_space<vmem>>, %arg4: memref<128x128xbf16, #tpu.memory_space<vmem>>, %arg5: memref<1x128xf32, #tpu.memory_space<vmem>>, %arg6: memref<8x128xf32, #tpu.memory_space<vmem>>, %arg7: memref<8x128xf32, #tpu.memory_space<vmem>>) attributes {dimension_semantics = [#tpu.dimension_semantics<parallel>, #tpu.dimension_semantics<parallel>, #tpu.dimension_semantics<arbitrary>], iteration_bounds = array<i64: 1, 1, 1>, scalar_prefetch = 0 : i64, scratch_operands = 1 : i64, tpu.core_type = #tpu.core_type<tc>, window_params = [{transform_indices = @transform_0, window_bounds = array<i64: 8, 128>}, {transform_indices = @transform_1, window_bounds = array<i64: 128, 128>}, {transform_indices = @transform_2, window_bounds = array<i64: 1, 128>}, {transform_indices = @transform_3, window_bounds = array<i64: 8, 128>}]} {
    %c0_i32 = arith.constant 0 : i32
    %0 = arith.cmpi eq, %arg2, %c0_i32 : i32
    %1 = arith.extui %0 : i1 to i32
    %c0_i32_0 = arith.constant 0 : i32
    %2 = arith.cmpi ne, %1, %c0_i32_0 : i32
    scf.if %2 {
      %cst_10 = arith.constant 0.000000e+00 : f32
      %13 = vector.broadcast %cst_10 : f32 to vector<8x128xf32>
      %c0_11 = arith.constant 0 : index
      %c0_12 = arith.constant 0 : index
      %14 = vector.load %arg7[%c0_11, %c0_12] : memref<8x128xf32, #tpu.memory_space<vmem>>, vector<8x128xf32>
      tpu.vector_store %arg7[%c0_11, %c0_12], %13 {strides = array<i32>} : memref<8x128xf32, #tpu.memory_space<vmem>>, vector<8x128xf32>,
    } else {
    }
    %c0 = arith.constant 0 : index
    %c0_1 = arith.constant 0 : index
    %3 = vector.load %arg7[%c0, %c0_1] : memref<8x128xf32, #tpu.memory_space<vmem>>, vector<8x128xf32>
    %c0_2 = arith.constant 0 : index
    %c0_3 = arith.constant 0 : index
    %4 = vector.load %arg3[%c0_2, %c0_3] : memref<8x128xf32, #tpu.memory_space<vmem>>, vector<8x128xf32>
    %5 = arith.truncf %4 : vector<8x128xf32> to vector<8x128xbf16>
    %c0_4 = arith.constant 0 : index
    %c0_5 = arith.constant 0 : index
    %6 = vector.load %arg4[%c0_4, %c0_5] : memref<128x128xbf16, #tpu.memory_space<vmem>>, vector<128x128xbf16>
    %cst = arith.constant dense<0.000000e+00> : vector<8x128xf32>
    %7 = tpu.matmul %5, %6, %cst {dimension_numbers = #tpu.dot_dimension_numbers<[1], [0], [0], [1], [0, 0, 1, 1], [], []>} : vector<8x128xbf16>, vector<128x128xbf16>, vector<8x128xf32> -> vector<8x128xf32>
    %8 = arith.addf %3, %7 : vector<8x128xf32>
    %c0_6 = arith.constant 0 : index
    %c0_7 = arith.constant 0 : index
    %9 = vector.load %arg7[%c0_6, %c0_7] : memref<8x128xf32, #tpu.memory_space<vmem>>, vector<8x128xf32>
    tpu.vector_store %arg7[%c0_6, %c0_7], %8 {strides = array<i32>} : memref<8x128xf32, #tpu.memory_space<vmem>>, vector<8x128xf32>,
    %c0_i32_8 = arith.constant 0 : i32
    %10 = arith.cmpi eq, %arg2, %c0_i32_8 : i32
    %11 = arith.extui %10 : i1 to i32
    %c0_i32_9 = arith.constant 0 : i32
    %12 = arith.cmpi ne, %11, %c0_i32_9 : i32
    scf.if %12 {
      %c0_10 = arith.constant 0 : index
      %c0_11 = arith.constant 0 : index
      %13 = vector.load %arg7[%c0_10, %c0_11] : memref<8x128xf32, #tpu.memory_space<vmem>>, vector<8x128xf32>
      %c0_12 = arith.constant 0 : index
      %c0_13 = arith.constant 0 : index
      %14 = vector.load %arg5[%c0_12, %c0_13] : memref<1x128xf32, #tpu.memory_space<vmem>>, vector<1x128xf32>
      %15 = vector.broadcast %14 : vector<1x128xf32> to vector<8x128xf32>
      %16 = arith.addf %13, %15 : vector<8x128xf32>
      %c0_14 = arith.constant 0 : index
      %c0_15 = arith.constant 0 : index
      %17 = vector.load %arg6[%c0_14, %c0_15] : memref<8x128xf32, #tpu.memory_space<vmem>>, vector<8x128xf32>
      tpu.vector_store %arg6[%c0_14, %c0_15], %16 {strides = array<i32>} : memref<8x128xf32, #tpu.memory_space<vmem>>, vector<8x128xf32>,
    } else {
    }
    return
  }
  func.func @transform_0(%arg0: i32, %arg1: i32, %arg2: i32) -> (i32, i32) {
    %c0_i32 = arith.constant 0 : i32
    return %arg0, %arg2 : i32, i32
  }
  func.func @transform_1(%arg0: i32, %arg1: i32, %arg2: i32) -> (i32, i32) {
    %c0_i32 = arith.constant 0 : i32
    return %arg2, %arg1 : i32, i32
  }
  func.func @transform_2(%arg0: i32, %arg1: i32, %arg2: i32) -> (i32, i32) {
    %c0_i32 = arith.constant 0 : i32
    %c0_i32_0 = arith.constant 0 : i32
    return %c0_i32, %arg1 : i32, i32
  }
  func.func @transform_3(%arg0: i32, %arg1: i32, %arg2: i32) -> (i32, i32) {
    %c0_i32 = arith.constant 0 : i32
    return %arg0, %arg1 : i32, i32
  }
}

</mosaic_0001>

<llo_original>
// kernel: tpu_custom_call.1
$region0: #{tpu_custom_call.1}
  #allocation0 [shape = 'u32[]', space=smem, size = 0x4, offset = 0x4, fixed_abs, tag = 'smem constant byte address 0x4 - core index']
  #allocation1 [shape = 'u32[144,128]{1,0:T(1,128)}', space=vmem, size = 0x12000, scoped, tag = 'internal scratch']
  #allocation2 [shape = 'f32[8,128]{1,0:T(8,128)}', space=vmem, size = 0x1000, scoped, tag = 'scratch operand']
  %s0 = inlined_call_operand.vmem [shape: f32[8,128], index: 0, kind: input, shape index: {}]
  %s1 = inlined_call_operand.vmem [shape: bf16[128,32], index: 1, kind: input, shape index: {}]
  %s2 = inlined_call_operand.vmem [shape: f32[1,32], index: 2, kind: input, shape index: {}]
  %s3 = inlined_call_operand.hbm [shape: f32[8,32], index: 3, kind: output, shape index: {}]
  %s4 = sld [smem:[#allocation0]]
  $region30: #{tpu_custom_call.1} parent=0
    _
  %s6 = ssub.s32 1, %s4
  %s7 = scalar_select 0, %s6, %s4
  $region1: #{tpu_custom_call.1} parent=0
    #allocation3 [shape = 'u8[4096]{0}', space=vmem, size = 0x1000, scoped, tag = 'output window, operand 0, single buffered']
    #allocation4 [shape = 's32[1]{0}', space=sflag, size = 0x4, scoped, tag = 'scoped memory for tpu_custom_call.1']
    %8 = vsyncpa [#allocation4], 0
    // Predicated region
    $region2: #{tpu_custom_call.1} parent=1 // pred_check
      _
    $region3: #{tpu_custom_call.1} parent=1 // pred_check_branch
      %10 = sbr.rel (0) target = $region5
    $region4: #{tpu_custom_call.1} parent=1 // pred_region
      _
    $region5: #{tpu_custom_call.1} parent=1 // pred_fallthru
      _
    // Predicated region
    $region6: #{tpu_custom_call.1} parent=1 // pred_check
      _
    $region7: #{tpu_custom_call.1} parent=1 // pred_check_branch
      %12 = sbr.rel (0) target = $region9
    $region8: #{tpu_custom_call.1} parent=1 // pred_region
      _
    $region9: #{tpu_custom_call.1} parent=1 // pred_fallthru
      _
    // Predicated region
    $region10: #{tpu_custom_call.1} parent=1 // pred_check
      _
    $region11: #{tpu_custom_call.1} parent=1 // pred_check_branch
      %14 = sbr.rel (0) target = $region13
    $region12: #{tpu_custom_call.1} parent=1 // pred_region
      _
    $region13: #{tpu_custom_call.1} parent=1 // pred_fallthru
      _
    %p16 = scmp.eq.s32.totalorder 0, 0
    // Predicated region
    $region14: #{tpu_custom_call.1} parent=1 // pred_check
      %p17 = pneg %p16
    $region15: #{tpu_custom_call.1} parent=1 // pred_check_branch
      %19 = sbr.rel (%p17) target = $region17
    $region16: #{tpu_custom_call.1} parent=1 // pred_region
      %20 = vst [vmem:[#allocation2] sm:$0xff] 0.0
    $region17: #{tpu_custom_call.1} parent=1 // pred_fallthru
      _
    %v21 = vld [vmem:[#allocation2] sm:$0xff]
    %v22 = vld [vmem:[%s0] sm:$0xff]
    %v23 = vpack.c.bf16 %v22, %v22
    %v24 = vld [vmem:[%s1] sm:$0xf]
    %v25 = vld [vmem:[%s1 + $0x4] sm:$0xf]
    %v26 = vld [vmem:[%s1 + $0x8] sm:$0xf]
    %v27 = vld [vmem:[%s1 + $0xc] sm:$0xf]
    %v28 = vld [vmem:[%s1 + $0x10] sm:$0xf]
    %v29 = vld [vmem:[%s1 + $0x14] sm:$0xf]
    %v30 = vld [vmem:[%s1 + $0x18] sm:$0xf]
    %v31 = vld [vmem:[%s1 + $0x1c] sm:$0xf]
    %v32 = vld [vmem:[%s1 + $0x20] sm:$0xf]
    %v33 = vld [vmem:[%s1 + $0x24] sm:$0xf]
    %v34 = vld [vmem:[%s1 + $0x28] sm:$0xf]
    %v35 = vld [vmem:[%s1 + $0x2c] sm:$0xf]
    %v36 = vld [vmem:[%s1 + $0x30] sm:$0xf]
    %v37 = vld [vmem:[%s1 + $0x34] sm:$0xf]
    %v38 = vld [vmem:[%s1 + $0x38] sm:$0xf]
    %v39 = vld [vmem:[%s1 + $0x3c] sm:$0xf]
    %v56 = vunpack.c.l.b16 %v24
    %v57 = vunpack.c.l.b16 %v25
    %v58 = vunpack.c.l.b16 %v26
    %v59 = vunpack.c.l.b16 %v27
    %v60 = vunpack.c.l.b16 %v28
    %v61 = vunpack.c.l.b16 %v29
    %v62 = vunpack.c.l.b16 %v30
    %v63 = vunpack.c.l.b16 %v31
    %v64 = vunpack.c.l.b16 %v32
    %v65 = vunpack.c.l.b16 %v33
    %v66 = vunpack.c.l.b16 %v34
    %v67 = vunpack.c.l.b16 %v35
    %v68 = vunpack.c.l.b16 %v36
    %v69 = vunpack.c.l.b16 %v37
    %v70 = vunpack.c.l.b16 %v38
    %v71 = vunpack.c.l.b16 %v39
    %v72 = vpack.c.b16 %v57, %v56
    %v73 = vpack.c.b16 %v59, %v58
    %v74 = vpack.c.b16 %v61, %v60
    %v75 = vpack.c.b16 %v63, %v62
    %v76 = vpack.c.b16 %v65, %v64
    %v77 = vpack.c.b16 %v67, %v66
    %v78 = vpack.c.b16 %v69, %v68
    %v79 = vpack.c.b16 %v71, %v70
    %88 = vmatprep.subr.bf16.mxu0 0
    %89 = vmatpush1.bf16.msra.mxu0 %v72
    %90 = vmatprep.subr.bf16.mxu0 0
    %91 = vmatpush1.bf16.msra.mxu0 %v73
    %92 = vmatprep.subr.bf16.mxu0 0
    %93 = vmatpush1.bf16.msra.mxu0 %v74
    %94 = vmatprep.subr.bf16.mxu0 0
    %95 = vmatpush1.bf16.msra.mxu0 %v75
    %96 = vmatprep.subr.bf16.mxu0 0
    %97 = vmatpush1.bf16.msra.mxu0 %v76
    %98 = vmatprep.subr.bf16.mxu0 0
    %99 = vmatpush1.bf16.msra.mxu0 %v77
    %100 = vmatprep.subr.bf16.mxu0 0
    %101 = vmatpush1.bf16.msra.mxu0 %v78
    %102 = vmatprep.subr.bf16.mxu0 0
    %103 = vmatpush1.bf16.msra.mxu0 %v79
    %104 = vmatprep.subr.bf16.mxu0 0
    %105 = vmatpush1.bf16.msra.mxu0 0
    %106 = vmatprep.subr.bf16.mxu0 0
    %107 = vmatpush1.bf16.msra.mxu0 0
    %108 = vmatprep.subr.bf16.mxu0 0
    %109 = vmatpush1.bf16.msra.mxu0 0
    %110 = vmatprep.subr.bf16.mxu0 0
    %111 = vmatpush1.bf16.msra.mxu0 0
    %112 = vmatprep.subr.bf16.mxu0 0
    %113 = vmatpush1.bf16.msra.mxu0 0
    %114 = vmatprep.subr.bf16.mxu0 0
    %115 = vmatpush1.bf16.msra.mxu0 0
    %116 = vmatprep.subr.bf16.mxu0 0
    %117 = vmatpush1.bf16.msra.mxu0 0
    %118 = vmatprep.subr.bf16.mxu0 0
    %119 = vmatpush1.bf16.msra.mxu0 0
    %120 = vmatprep.mubr.bf16.mxu0 0
    %121 = vmatmul.mubr.bf16.gmra.mrb[0].mxu0 %v23
    %v122 = vpop.f32.mrb[0].mxu0
    %v123 = vadd.f32 0.0, %v122
    %v124 = vpop.f32.mrb[0].mxu0
    %v125 = vpop.f32.mrb[0].mxu0
    %v126 = vpop.f32.mrb[0].mxu0
    %127 = vdwg.mxu0
    %v128 = vadd.f32 %v21, %v123
    %129 = vst [vmem:[#allocation2] sm:$0xff] %v128
    // Predicated region
    $region18: #{tpu_custom_call.1} parent=1 // pred_check
      %p130 = pneg %p16
    $region19: #{tpu_custom_call.1} parent=1 // pred_check_branch
      %132 = sbr.rel (%p130) target = $region21
    $region20: #{tpu_custom_call.1} parent=1 // pred_region
      %v133 = vld [vmem:[#allocation2] sm:$0xff]
      %v134 = vld [vmem:[%s2] sm:$0x1]
      %v136 = vlaneseq
      %v137 = vshrl.u32 %v136, 7
      %v138 = vsub.s32 0, %v137
      %v139 = vrot.slane %v134, %v138
      %v141 = vadd.f32 %v133, %v139
      %142 = vst [vmem:[#allocation3] sm:$0xff] %v141
    $region21: #{tpu_custom_call.1} parent=1 // pred_fallthru
      _
    // Predicated region
    $region22: #{tpu_custom_call.1} parent=1 // pred_check
      _
    $region23: #{tpu_custom_call.1} parent=1 // pred_check_branch
      %144 = sbr.rel (0) target = $region25
    $region24: #{tpu_custom_call.1} parent=1 // pred_region
      %s146 = ssub.s32 128, 128
      %147 = vsyncadd [#allocation4], %s146
      %s149 = sshll.u32 [#allocation3], 4
      %s150 = int_to_ptr.vmem [resolvable:$true] %s149
      %152 = dma.vmem_to_hbm [thread:$0]  %s150, 128, %s3, [#allocation4]
    $region25: #{tpu_custom_call.1} parent=1 // pred_fallthru
      _
    // Predicated region
    $region26: #{tpu_custom_call.1} parent=1 // pred_check
      _
    $region27: #{tpu_custom_call.1} parent=1 // pred_check_branch
      %154 = sbr.rel (0) target = $region29
    $region28: #{tpu_custom_call.1} parent=1 // pred_region
      %155 = dma.done [#allocation4], 128
    $region29: #{tpu_custom_call.1} parent=1 // pred_fallthru
      _
    %156 = vsyncpa [#allocation4], 1

</llo_original>
